<compile_context>
chip_gen: v6e
topology: v6e:2x2x1
jax: 0.10.0
libtpu: 0.0.40
codegen_flags: <defaults>
</compile_context>

<pallas_src>
import jax
import jax.numpy as jnp
from jax.experimental import pallas as pl
from jax.experimental.pallas import tpu as pltpu

N, CIN, H, W = 2, 3, 16, 16
COUT = 16
K = 3           # kernel_size
EPS = 1e-5      # BatchNorm2d default eps


def conv_bn_kernel(wt_ref, pt_ref, gb_ref, out_ref):
    """Fused Conv2d(3x3, pad=1) + BatchNorm2d (training-mode batch stats).

    wt_ref : [COUT, K*K*CIN]   bf16  conv weights, tap-major columns
    pt_ref : [K*K*CIN, N*H*W]  bf16  im2col patches, transposed (lane-dense)
    gb_ref : [COUT, 2]         f32   col 0 = gamma, col 1 = beta
    out_ref: [N, COUT, H*W]    f32   NCHW with flattened spatial
    """
    nb, _, hw = out_ref.shape

    # Conv as a single MXU matmul: [16, 27] @ [27, 512] -> f32 [16, 512].
    acc = jnp.dot(wt_ref[...], pt_ref[...], preferred_element_type=jnp.float32)

    # Per-channel training-mode BN statistics over the N*H*W columns (one pass).
    mean = jnp.mean(acc, axis=1, keepdims=True)                 # [COUT, 1]
    msq = jnp.mean(acc * acc, axis=1, keepdims=True)            # [COUT, 1]
    var = msq - mean * mean                                     # biased variance

    # Fused affine: out = acc * scale + shift.
    scale = jax.lax.rsqrt(var + EPS) * gb_ref[:, 0:1]           # [COUT, 1]
    shift = gb_ref[:, 1:2] - mean * scale                       # [COUT, 1]
    y = acc * scale + shift                                     # [COUT, N*H*W]

    # Store per-sample lane-dense slabs; result is already NCHW-ordered.
    for b in range(nb):
        out_ref[b] = y[:, b * hw:(b + 1) * hw]


@jax.jit
def conv_bn_forward(x_nchw, w_oihw, bias, gamma, beta):
    """x_nchw: [N, CIN, H, W] f32 -> [N, COUT, H, W] f32."""
    n = x_nchw.shape[0]
    # `bias` is intentionally unused: training-mode BatchNorm's mean subtraction
    # cancels a constant per-channel bias exactly (variance unchanged).
    del bias

    # im2col directly in the transposed layout the kernel consumes
    # ([K*K*CIN, N*H*W]); built from NCHW (no NHWC round trip). These ops fuse
    # under jit into a single small fusion.
    xpad = jnp.pad(x_nchw, ((0, 0), (0, 0), (1, 1), (1, 1)))     # [N,CIN,H+2,W+2]
    taps = [xpad[:, :, kh:kh + H, kw:kw + W]
            for kh in range(K) for kw in range(K)]               # 9 x [N,CIN,H,W]
    patches = jnp.stack(taps, axis=0)                            # [9,N,CIN,H,W]
    patches = jnp.transpose(patches, (0, 2, 1, 3, 4))            # [9,CIN,N,H,W]
    patches_t = patches.reshape(K * K * CIN, n * H * W).astype(jnp.bfloat16)

    # Weights OIHW -> [COUT, (kh, kw, cin)] to match the patch-row ordering.
    w_t = jnp.transpose(w_oihw, (0, 2, 3, 1)).reshape(COUT, K * K * CIN)
    w_t = w_t.astype(jnp.bfloat16)

    # Pack gamma/beta into one small parameter tile.
    gb = jnp.stack([gamma, beta], axis=1).astype(jnp.float32)    # [COUT, 2]

    out = pl.pallas_call(
        conv_bn_kernel,
        out_shape=jax.ShapeDtypeStruct((n, COUT, H * W), jnp.float32),
        in_specs=[
            pl.BlockSpec(memory_space=pltpu.MemorySpace.VMEM),
            pl.BlockSpec(memory_space=pltpu.MemorySpace.VMEM),
            pl.BlockSpec(memory_space=pltpu.MemorySpace.VMEM),
        ],
        out_specs=pl.BlockSpec(memory_space=pltpu.MemorySpace.VMEM),
    )(w_t, patches_t, gb)

    # Free reshape: [N, COUT, H*W] -> [N, COUT, H, W] (already NCHW ordering).
    return out.reshape(n, COUT, H, W)


def reference_forward(x_nchw, w_oihw, bias, gamma, beta):
    """Pure-JAX f32 reference (conv via lax, BN with batch stats)."""
    conv = jax.lax.conv_general_dilated(
        x_nchw, w_oihw, window_strides=(1, 1), padding=((1, 1), (1, 1)),
        dimension_numbers=("NCHW", "OIHW", "NCHW"))
    conv = conv + bias.reshape(1, COUT, 1, 1)
    mean = conv.mean(axis=(0, 2, 3), keepdims=True)
    var = jnp.mean(jnp.square(conv - mean), axis=(0, 2, 3), keepdims=True)
    inv = jax.lax.rsqrt(var + EPS)
    return (conv - mean) * inv * gamma.reshape(1, COUT, 1, 1) \
        + beta.reshape(1, COUT, 1, 1)


if __name__ == "__main__":
    key = jax.random.PRNGKey(0)
    kx, kw, kb, kg, kbe = jax.random.split(key, 5)

    # Deterministic synthetic parameters (shapes from the module __init__).
    x = jax.random.normal(kx, (N, CIN, H, W), dtype=jnp.float32)
    w = jax.random.normal(kw, (COUT, CIN, K, K), dtype=jnp.float32) * 0.1
    b = jax.random.normal(kb, (COUT,), dtype=jnp.float32) * 0.1
    gamma = 1.0 + 0.1 * jax.random.normal(kg, (COUT,), dtype=jnp.float32)
    beta = 0.1 * jax.random.normal(kbe, (COUT,), dtype=jnp.float32)

    out = conv_bn_forward(x, w, b, gamma, beta)
    out = jax.block_until_ready(out)

    ref = reference_forward(x, w, b, gamma, beta)
    assert out.shape == (N, COUT, H, W)
    # Tolerance accounts for bf16 MXU operands (f32 accumulation) vs f32 ref.
    assert jnp.allclose(out, ref, atol=2e-2, rtol=2e-2), "mismatch vs reference"

    print("KERNEL_OK")
</pallas_src>

<mosaic_0001>
module attributes {stable_mosaic.version = 11 : i64} {
  func.func @conv_bn_kernel(%arg0: memref<16x27xbf16, #tpu.memory_space<vmem>>, %arg1: memref<27x512xbf16, #tpu.memory_space<vmem>>, %arg2: memref<16x2xf32, #tpu.memory_space<vmem>>, %arg3: memref<2x16x256xf32, #tpu.memory_space<vmem>>) attributes {dimension_semantics = [], scalar_prefetch = 0 : i64, scratch_operands = 0 : i64, tpu.core_type = #tpu.core_type<tc>} {
    %c0 = arith.constant 0 : index
    %c0_0 = arith.constant 0 : index
    %0 = vector.load %arg0[%c0, %c0_0] : memref<16x27xbf16, #tpu.memory_space<vmem>>, vector<16x27xbf16>
    %c0_1 = arith.constant 0 : index
    %c0_2 = arith.constant 0 : index
    %1 = vector.load %arg1[%c0_1, %c0_2] : memref<27x512xbf16, #tpu.memory_space<vmem>>, vector<27x512xbf16>
    %cst = arith.constant dense<0.000000e+00> : vector<16x512xf32>
    %2 = tpu.matmul %0, %1, %cst {dimension_numbers = #tpu.dot_dimension_numbers<[1], [0], [0], [1], [0, 0, 1, 1], [], []>} : vector<16x27xbf16>, vector<27x512xbf16>, vector<16x512xf32> -> vector<16x512xf32>
    %cst_3 = arith.constant dense<0.000000e+00> : vector<16xf32>
    %3 = vector.multi_reduction <add>, %2, %cst_3 [1] : vector<16x512xf32> to vector<16xf32>
    %4 = vector.shape_cast %3 : vector<16xf32> to vector<16x1xf32>
    %cst_4 = arith.constant 5.120000e+02 : f32
    %5 = vector.broadcast %cst_4 : f32 to vector<16x1xf32>
    %6 = arith.divf %4, %5 : vector<16x1xf32>
    %7 = arith.mulf %2, %2 : vector<16x512xf32>
    %cst_5 = arith.constant dense<0.000000e+00> : vector<16xf32>
    %8 = vector.multi_reduction <add>, %7, %cst_5 [1] : vector<16x512xf32> to vector<16xf32>
    %9 = vector.shape_cast %8 : vector<16xf32> to vector<16x1xf32>
    %cst_6 = arith.constant 5.120000e+02 : f32
    %10 = vector.broadcast %cst_6 : f32 to vector<16x1xf32>
    %11 = arith.divf %9, %10 : vector<16x1xf32>
    %12 = arith.mulf %6, %6 : vector<16x1xf32>
    %13 = arith.subf %11, %12 : vector<16x1xf32>
    %cst_7 = arith.constant 9.99999974E-6 : f32
    %14 = vector.broadcast %cst_7 : f32 to vector<16x1xf32>
    %15 = arith.addf %13, %14 : vector<16x1xf32>
    %16 = math.rsqrt %15 : vector<16x1xf32>
    %c0_8 = arith.constant 0 : index
    %c0_9 = arith.constant 0 : index
    %17 = vector.load %arg2[%c0_8, %c0_9] : memref<16x2xf32, #tpu.memory_space<vmem>>, vector<16x1xf32>
    %18 = arith.mulf %16, %17 : vector<16x1xf32>
    %c0_10 = arith.constant 0 : index
    %c1 = arith.constant 1 : index
    %19 = vector.load %arg2[%c0_10, %c1] : memref<16x2xf32, #tpu.memory_space<vmem>>, vector<16x1xf32>
    %20 = arith.mulf %6, %18 : vector<16x1xf32>
    %21 = arith.subf %19, %20 : vector<16x1xf32>
    %22 = vector.broadcast %18 : vector<16x1xf32> to vector<16x512xf32>
    %23 = arith.mulf %2, %22 : vector<16x512xf32>
    %24 = vector.broadcast %21 : vector<16x1xf32> to vector<16x512xf32>
    %25 = arith.addf %23, %24 : vector<16x512xf32>
    %26 = vector.extract_strided_slice %25 {offsets = [0, 0], sizes = [16, 256], strides = [1, 1]} : vector<16x512xf32> to vector<16x256xf32>
    %c0_11 = arith.constant 0 : index
    %c0_12 = arith.constant 0 : index
    %c0_13 = arith.constant 0 : index
    %27 = vector.load %arg3[%c0_11, %c0_12, %c0_13] : memref<2x16x256xf32, #tpu.memory_space<vmem>>, vector<1x16x256xf32>
    %28 = vector.shape_cast %27 : vector<1x16x256xf32> to vector<16x256xf32>
    %29 = vector.shape_cast %26 : vector<16x256xf32> to vector<1x16x256xf32>
    tpu.vector_store %arg3[%c0_11, %c0_12, %c0_13], %29 {strides = array<i32>} : memref<2x16x256xf32, #tpu.memory_space<vmem>>, vector<1x16x256xf32>,
    %30 = vector.extract_strided_slice %25 {offsets = [0, 256], sizes = [16, 256], strides = [1, 1]} : vector<16x512xf32> to vector<16x256xf32>
    %c1_14 = arith.constant 1 : index
    %c0_15 = arith.constant 0 : index
    %c0_16 = arith.constant 0 : index
    %31 = vector.load %arg3[%c1_14, %c0_15, %c0_16] : memref<2x16x256xf32, #tpu.memory_space<vmem>>, vector<1x16x256xf32>
    %32 = vector.shape_cast %31 : vector<1x16x256xf32> to vector<16x256xf32>
    %33 = vector.shape_cast %30 : vector<16x256xf32> to vector<1x16x256xf32>
    tpu.vector_store %arg3[%c1_14, %c0_15, %c0_16], %33 {strides = array<i32>} : memref<2x16x256xf32, #tpu.memory_space<vmem>>, vector<1x16x256xf32>,
    return
  }
}

</mosaic_0001>

<llo_original>
// kernel: conv_bn_forward.1
$region0: #{conv_bn_forward.1}
  #allocation0 [shape = 'u32[]', space=smem, size = 0x4, offset = 0x4, fixed_abs, tag = 'smem constant byte address 0x4 - core index']
  #allocation1 [shape = 'u32[144,128]{1,0:T(1,128)}', space=vmem, size = 0x12000, scoped, tag = 'internal scratch']
  %s0 = inlined_call_operand.vmem [shape: bf16[16,27], index: 0, kind: input, shape index: {}]
  %s1 = inlined_call_operand.vmem [shape: bf16[27,512], index: 1, kind: input, shape index: {}]
  %s2 = inlined_call_operand.vmem [shape: f32[16,2], index: 2, kind: input, shape index: {}]
  %s3 = inlined_call_operand.vmem [shape: f32[2,16,256], index: 3, kind: output, shape index: {}]
  %s4 = sld [smem:[#allocation0]]
  $region22: #{conv_bn_forward.1} parent=0
    _
  %s6 = ssub.s32 1, %s4
  %s7 = scalar_select 0, %s6, %s4
  // Predicated region
  $region2: #{conv_bn_forward.1} parent=0 // pred_check
    _
  $region3: #{conv_bn_forward.1} parent=0 // pred_check_branch
    %9 = sbr.rel (0) target = $region5
  $region4: #{conv_bn_forward.1} parent=0 // pred_region
    _
  $region5: #{conv_bn_forward.1} parent=0 // pred_fallthru
    _
  // Predicated region
  $region6: #{conv_bn_forward.1} parent=0 // pred_check
    _
  $region7: #{conv_bn_forward.1} parent=0 // pred_check_branch
    %11 = sbr.rel (0) target = $region9
  $region8: #{conv_bn_forward.1} parent=0 // pred_region
    _
  $region9: #{conv_bn_forward.1} parent=0 // pred_fallthru
    _
  // Predicated region
  $region10: #{conv_bn_forward.1} parent=0 // pred_check
    _
  $region11: #{conv_bn_forward.1} parent=0 // pred_check_branch
    %13 = sbr.rel (0) target = $region13
  $region12: #{conv_bn_forward.1} parent=0 // pred_region
    _
  $region13: #{conv_bn_forward.1} parent=0 // pred_fallthru
    _
  %v15 = vld [vmem:[%s0] sm:$0xf]
  %v16 = vld [vmem:[%s0 + $0x4] sm:$0xf]
  %v17 = vld [vmem:[%s1] sm:$0xff]
  %v18 = vld [vmem:[%s1 + $0x8] sm:$0xff]
  %v19 = vld [vmem:[%s1 + $0x10] sm:$0xff]
  %v20 = vld [vmem:[%s1 + $0x18] sm:$0xff]
  %v21 = vld [vmem:[%s1 + $0x20] sm:$0xff]
  %v22 = vld [vmem:[%s1 + $0x28] sm:$0xff]
  %v23 = vld [vmem:[%s1 + $0x30] sm:$0x33]
  %v24 = vld [vmem:[%s1 + $0x38] sm:$0x33]
  %v27 = vunpack.c.l.b16 %v15
  %v28 = vunpack.c.l.b16 %v16
  %v29 = vpack.c.b16 %v28, %v27
  %v38 = vunpack.c.l.b16 %v17
  %v39 = vunpack.c.h.b16 %v17
  %v40 = vunpack.c.l.b16 %v18
  %v41 = vunpack.c.h.b16 %v18
  %v42 = vunpack.c.l.b16 %v19
  %v43 = vunpack.c.h.b16 %v19
  %v44 = vunpack.c.l.b16 %v20
  %v45 = vunpack.c.h.b16 %v20
  %v46 = vunpack.c.l.b16 %v21
  %v47 = vunpack.c.h.b16 %v21
  %v48 = vunpack.c.l.b16 %v22
  %v49 = vunpack.c.h.b16 %v22
  %v50 = vunpack.c.l.b16 %v23
  %v51 = vunpack.c.h.b16 %v23
  %v52 = vunpack.c.l.b16 %v24
  %v53 = vunpack.c.h.b16 %v24
  %v54 = vpack.c.b16 %v42, %v38
  %v55 = vpack.c.b16 %v43, %v39
  %v56 = vpack.c.b16 %v44, %v40
  %v57 = vpack.c.b16 %v45, %v41
  %v58 = vpack.c.b16 %v50, %v46
  %v59 = vpack.c.b16 %v51, %v47
  %v60 = vpack.c.b16 %v52, %v48
  %v61 = vpack.c.b16 %v53, %v49
  %vm66 = vcmask 220160
  %v68 = vsel %vm66, %v29, 0
  %vm70 = vcmask 1044480
  %vm71 = vcmask 1045504
  %v72 = vsel %vm70, 4294967295, 65535
  %v73 = vsel %vm71, %v72, 0
  %v75 = vand.u32 %v58, %v73
  %v78 = vand.u32 %v59, %v73
  %v81 = vand.u32 %v60, %v73
  %v84 = vand.u32 %v61, %v73
  %86 = vmatprep.subr.bf16.mxu0 0
  %87 = vmatpush1.bf16.msra.mxu0 0
  %88 = vmatprep.subr.bf16.mxu0 0
  %89 = vmatpush1.bf16.msra.mxu0 0
  %90 = vmatprep.subr.bf16.mxu0 0
  %91 = vmatpush1.bf16.msra.mxu0 0
  %92 = vmatprep.subr.bf16.mxu0 0
  %93 = vmatpush1.bf16.msra.mxu0 0
  %94 = vmatprep.subr.bf16.mxu0 0
  %95 = vmatpush1.bf16.msra.mxu0 0
  %96 = vmatprep.subr.bf16.mxu0 0
  %97 = vmatpush1.bf16.msra.mxu0 0
  %98 = vmatprep.subr.bf16.mxu0 %v78
  %99 = vmatpush1.bf16.msra.mxu0 %v75
  %100 = vmatprep.subr.bf16.mxu0 %v55
  %101 = vmatpush1.bf16.msra.mxu0 %v54
  %102 = vmatprep.subr.bf16.mxu0 0
  %103 = vmatpush2.bf16.msra.mxu0 0
  %104 = vmatprep.subr.bf16.mxu0 0
  %105 = vmatpush2.bf16.msra.mxu0 0
  %106 = vmatprep.subr.bf16.mxu0 0
  %107 = vmatpush2.bf16.msra.mxu0 0
  %108 = vmatprep.subr.bf16.mxu0 0
  %109 = vmatpush2.bf16.msra.mxu0 0
  %110 = vmatprep.subr.bf16.mxu0 0
  %111 = vmatpush2.bf16.msra.mxu0 0
  %112 = vmatprep.subr.bf16.mxu0 0
  %113 = vmatpush2.bf16.msra.mxu0 0
  %114 = vmatprep.subr.bf16.mxu0 0
  %115 = vmatpush2.bf16.msra.mxu0 0
  %116 = vmatprep.subr.bf16.mxu0 0
  %117 = vmatpush2.bf16.msra.mxu0 0
  %118 = vmatprep.mubr.bf16.mxu0 0
  %119 = vmatmul.mubr.bf16.gmra.mxu0 %v68
  %v120 = vpop.f32.mrf.mxu0
  %v121 = vadd.f32 0.0, %v120
  %v122 = vpop.f32.mrf.mxu0
  %v123 = vadd.f32 0.0, %v122
  %v124 = vpop.f32.mrf.mxu0
  %v125 = vadd.f32 0.0, %v124
  %v126 = vpop.f32.mrf.mxu0
  %v127 = vadd.f32 0.0, %v126
  %128 = vdwg.mxu0
  %129 = vmatprep.subr.bf16.mxu0 0
  %130 = vmatpush1.bf16.msra.mxu0 0
  %131 = vmatprep.subr.bf16.mxu0 0
  %132 = vmatpush1.bf16.msra.mxu0 0
  %133 = vmatprep.subr.bf16.mxu0 0
  %134 = vmatpush1.bf16.msra.mxu0 0
  %135 = vmatprep.subr.bf16.mxu0 0
  %136 = vmatpush1.bf16.msra.mxu0 0
  %137 = vmatprep.subr.bf16.mxu0 0
  %138 = vmatpush1.bf16.msra.mxu0 0
  %139 = vmatprep.subr.bf16.mxu0 0
  %140 = vmatpush1.bf16.msra.mxu0 0
  %141 = vmatprep.subr.bf16.mxu0 %v84
  %142 = vmatpush1.bf16.msra.mxu0 %v81
  %143 = vmatprep.subr.bf16.mxu0 %v57
  %144 = vmatpush1.bf16.msra.mxu0 %v56
  %145 = vmatprep.subr.bf16.mxu0 0
  %146 = vmatpush2.bf16.msra.mxu0 0
  %147 = vmatprep.subr.bf16.mxu0 0
  %148 = vmatpush2.bf16.msra.mxu0 0
  %149 = vmatprep.subr.bf16.mxu0 0
  %150 = vmatpush2.bf16.msra.mxu0 0
  %151 = vmatprep.subr.bf16.mxu0 0
  %152 = vmatpush2.bf16.msra.mxu0 0
  %153 = vmatprep.subr.bf16.mxu0 0
  %154 = vmatpush2.bf16.msra.mxu0 0
  %155 = vmatprep.subr.bf16.mxu0 0
  %156 = vmatpush2.bf16.msra.mxu0 0
  %157 = vmatprep.subr.bf16.mxu0 0
  %158 = vmatpush2.bf16.msra.mxu0 0
  %159 = vmatprep.subr.bf16.mxu0 0
  %160 = vmatpush2.bf16.msra.mxu0 0
  %161 = vmatprep.mubr.bf16.mxu0 0
  %162 = vmatmul.mubr.bf16.gmra.mxu0 %v68
  %v163 = vpop.f32.mrf.mxu0
  %v164 = vadd.f32 0.0, %v163
  %v165 = vpop.f32.mrf.mxu0
  %v166 = vadd.f32 0.0, %v165
  %v167 = vpop.f32.mrf.mxu0
  %v168 = vadd.f32 0.0, %v167
  %v169 = vpop.f32.mrf.mxu0
  %v170 = vadd.f32 0.0, %v169
  %171 = vdwg.mxu0
  %v172 = vadd.f32 %v121, %v123
  %v173 = vadd.f32 %v172, %v164
  %v174 = vadd.f32 %v173, %v166
  %175 = vadd.xlane.f32.xlu0 %v174
  %v176 = vpop.xlane.xlu0 %175
  %v177 = vadd.f32 %v125, %v127
  %v178 = vadd.f32 %v177, %v168
  %v179 = vadd.f32 %v178, %v170
  %180 = vadd.xlane.f32.xlu0 %v179
  %v181 = vpop.xlane.xlu0 %180
  %v182 = vrcp.pop 512.0
  %v183 = vmul.f32 %v176, %v182
  %v184 = vmul.f32 %v181, %v182
  %v185 = vmul.f32 %v121, %v121
  %v186 = vmul.f32 %v123, %v123
  %v187 = vmul.f32 %v164, %v164
  %v188 = vmul.f32 %v166, %v166
  %v189 = vmul.f32 %v125, %v125
  %v190 = vmul.f32 %v127, %v127
  %v191 = vmul.f32 %v168, %v168
  %v192 = vmul.f32 %v170, %v170
  %v193 = vadd.f32 %v185, %v186
  %v194 = vadd.f32 %v193, %v187
  %v195 = vadd.f32 %v194, %v188
  %196 = vadd.xlane.f32.xlu0 %v195
  %v197 = vpop.xlane.xlu0 %196
  %v198 = vadd.f32 %v189, %v190
  %v199 = vadd.f32 %v198, %v191
  %v200 = vadd.f32 %v199, %v192
  %201 = vadd.xlane.f32.xlu0 %v200
  %v202 = vpop.xlane.xlu0 %201
  %v203 = vmul.f32 %v197, %v182
  %v204 = vmul.f32 %v202, %v182
  %v205 = vmul.f32 %v183, %v183
  %v206 = vmul.f32 %v184, %v184
  %v207 = vsub.f32 %v203, %v205
  %v208 = vsub.f32 %v204, %v206
  %v209 = vadd.f32 %v207, 1e-05
  %v210 = vadd.f32 %v208, 1e-05
  %v211 = vrsqrt.pop %v209
  %v212 = vrsqrt.pop %v210
  %v213 = vld [vmem:[%s2] sm:$0xff]
  %v214 = vld [vmem:[%s2 + $0x8] sm:$0xff]
  %v215 = vmul.f32 %v211, %v213
  %v216 = vmul.f32 %v212, %v214
  %v217 = vmul.f32 %v183, %v215
  %v218 = vmul.f32 %v184, %v216
  %221 = vrot.lane.b32.xlu0 %v217, 1
  %v222 = vpop.permute.xlu0 %221
  %223 = vrot.lane.b32.xlu0 %v218, 1
  %v224 = vpop.permute.xlu0 %223
  %v227 = vsub.f32 %v213, %v222
  %v228 = vsub.f32 %v214, %v224
  %230 = vset.pattern.permute.xlu0 0
  %231 = vperm.xlu0 %230, %v215
  %v232 = vpop.permute.xlu0 %231
  %235 = vset.pattern.permute.xlu0 0
  %236 = vperm.xlu0 %235, %v216
  %v237 = vpop.permute.xlu0 %236
  %v239 = vmul.f32 %v121, %v232
  %v240 = vmul.f32 %v123, %v232
  %v241 = vmul.f32 %v164, %v232
  %v242 = vmul.f32 %v166, %v232
  %v243 = vmul.f32 %v125, %v237
  %v244 = vmul.f32 %v127, %v237
  %v245 = vmul.f32 %v168, %v237
  %v246 = vmul.f32 %v170, %v237
  %248 = vset.pattern.permute.xlu0 1
  %249 = vperm.xlu0 %248, %v227
  %v250 = vpop.permute.xlu0 %249
  %253 = vset.pattern.permute.xlu0 1
  %254 = vperm.xlu0 %253, %v228
  %v255 = vpop.permute.xlu0 %254
  %v257 = vadd.f32 %v239, %v250
  %v258 = vadd.f32 %v240, %v250
  %v259 = vadd.f32 %v241, %v250
  %v260 = vadd.f32 %v242, %v250
  %v261 = vadd.f32 %v243, %v255
  %v262 = vadd.f32 %v244, %v255
  %v263 = vadd.f32 %v245, %v255
  %v264 = vadd.f32 %v246, %v255
  %265 = vst [vmem:[%s3] sm:$0xff] %v257
  %266 = vst [vmem:[%s3 + $0x8] sm:$0xff] %v258
  %267 = vst [vmem:[%s3 + $0x10] sm:$0xff] %v261
  %268 = vst [vmem:[%s3 + $0x18] sm:$0xff] %v262
  %s269 = scalar_lea.vmem %s3, 32
  %270 = vst [vmem:[%s269] sm:$0xff] %v259
  %271 = vst [vmem:[%s269 + $0x8] sm:$0xff] %v260
  %272 = vst [vmem:[%s269 + $0x10] sm:$0xff] %v263
  %273 = vst [vmem:[%s269 + $0x18] sm:$0xff] %v264
  // Predicated region
  $region14: #{conv_bn_forward.1} parent=0 // pred_check
    _
  $region15: #{conv_bn_forward.1} parent=0 // pred_check_branch
    %275 = sbr.rel (0) target = $region17
  $region16: #{conv_bn_forward.1} parent=0 // pred_region
    _
  $region17: #{conv_bn_forward.1} parent=0 // pred_fallthru
    _
  // Predicated region
  $region18: #{conv_bn_forward.1} parent=0 // pred_check
    _
  $region19: #{conv_bn_forward.1} parent=0 // pred_check_branch
    %277 = sbr.rel (0) target = $region21
  $region20: #{conv_bn_forward.1} parent=0 // pred_region
    _
  $region21: #{conv_bn_forward.1} parent=0 // pred_fallthru
    _

</llo_original>
